<compile_context>
chip_gen: v7x
topology: tpu7x:2x2x1
jax: 0.10.0
libtpu: 0.0.40
codegen_flags: <defaults>
</compile_context>

<pallas_src>
import functools

import jax
import jax.numpy as jnp
from jax.experimental import pallas as pl
from jax.experimental.pallas import tpu as pltpu


def gestures_kernel(x_ref, w1_ref, b1_ref, w2_ref, b2_ref, w3_ref, b3_ref, o_ref):
    x = x_ref[...]                                                      # (BR, 64) bf16

    # fc1 + ReLU   (bf16 x bf16 -> f32 accumulate, f32 bias)
    h1 = jnp.dot(x, w1_ref[...], preferred_element_type=jnp.float32) + b1_ref[...]
    h1 = jnp.maximum(h1, 0.0)                                           # (BR, 32) f32

    # fc2 + ReLU
    h2 = jnp.dot(h1.astype(w2_ref.dtype), w2_ref[...],
                 preferred_element_type=jnp.float32) + b2_ref[...]
    h2 = jnp.maximum(h2, 0.0)                                           # (BR, 16) f32

    # fc3 + softmax over the feature axis
    logits = jnp.dot(h2.astype(w3_ref.dtype), w3_ref[...],
                     preferred_element_type=jnp.float32) + b3_ref[...]  # (BR, dim) f32
    m = jnp.max(logits, axis=-1, keepdims=True)
    e = jnp.exp(logits - m)
    s = jnp.sum(e, axis=-1, keepdims=True)
    # divide -> EUP reciprocal + VALU multiply (free slot)
    o_ref[...] = (e * pl.reciprocal(s, approx=True)).astype(o_ref.dtype)


@functools.partial(jax.jit, static_argnames=("block_rows",))
def gestures_forward(x, params, *, block_rows=512):
    """x: (B, 64) float32; params: dict of w1,b1,w2,b2,w3,b3 (f32)."""
    B, K = x.shape
    dim = params["w3"].shape[1]

    # Row-block: >=512 for large B (per-step overhead amortization); clamp for small B.
    if block_rows >= B:
        br = B                               # block == full dim is always legal
    else:
        br = max(8, (block_rows // 8) * 8)   # keep the sublane (8) constraint
    grid = (pl.cdiv(B, br),)

    # Cast matmul operands to bf16 in the wrapper so the HBM copy of x is bf16
    # (halves the dominant HBM read). Biases stay f32 (added post f32-accumulation).
    compute_dtype = jnp.bfloat16
    x_in = x.astype(compute_dtype)
    w1 = params["w1"].astype(compute_dtype)
    w2 = params["w2"].astype(compute_dtype)
    w3 = params["w3"].astype(compute_dtype)
    b1, b2, b3 = params["b1"], params["b2"], params["b3"]

    # Weights/biases: constant index_map -> stay resident in VMEM across grid steps.
    const = lambda shape: pl.BlockSpec(shape, lambda i: (0, 0))

    return pl.pallas_call(
        gestures_kernel,
        out_shape=jax.ShapeDtypeStruct((B, dim), jnp.float32),
        grid=grid,
        in_specs=[
            pl.BlockSpec((br, K), lambda i: (i, 0)),     # x: tiled over batch
            const(w1.shape), const(b1.shape),
            const(w2.shape), const(b2.shape),
            const(w3.shape), const(b3.shape),
        ],
        out_specs=pl.BlockSpec((br, dim), lambda i: (i, 0)),
        compiler_params=pltpu.CompilerParams(
            dimension_semantics=("parallel",),           # shards across v7x's 2 TCs
            vmem_limit_bytes=32 << 20,
        ),
    )(x_in, w1, b1, w2, b2, w3, b3)


def init_params(key, dim):
    """Deterministic init matching the layer shapes of GesturesNet.__init__."""
    ks = jax.random.split(key, 6)
    # stored as (in, out) so x @ W + b == PyTorch x @ W_pt.T + b; biases kept 2D (1, out)
    w1 = jax.random.normal(ks[0], (64, 32), jnp.float32) * 0.1
    b1 = jax.random.normal(ks[1], (1, 32), jnp.float32) * 0.1
    w2 = jax.random.normal(ks[2], (32, 16), jnp.float32) * 0.1
    b2 = jax.random.normal(ks[3], (1, 16), jnp.float32) * 0.1
    w3 = jax.random.normal(ks[4], (16, dim), jnp.float32) * 0.1
    b3 = jax.random.normal(ks[5], (1, dim), jnp.float32) * 0.1
    return dict(w1=w1, b1=b1, w2=w2, b2=b2, w3=w3, b3=b3)


def reference_forward(x, p, compute_dtype=jnp.bfloat16):
    """Pure-JAX reference mirroring the kernel's bf16-operand / f32-accumulate math."""
    q = lambda a: a.astype(compute_dtype).astype(jnp.float32)
    h1 = jnp.maximum(q(x) @ q(p["w1"]) + p["b1"], 0.0)
    h2 = jnp.maximum(q(h1) @ q(p["w2"]) + p["b2"], 0.0)
    logits = q(h2) @ q(p["w3"]) + p["b3"]
    return jax.nn.softmax(logits, axis=1)


if __name__ == "__main__":
    labels = ["fist", "open", "point", "pinch", "wave"]   # dim = 5
    dim = len(labels)

    key = jax.random.PRNGKey(0)
    kx, kp, kx2 = jax.random.split(key, 3)
    params = init_params(kp, dim)

    # --- small-shape check (single block) ---
    B = 8
    x = jax.random.normal(kx, (B, 64), jnp.float32)
    out = jax.block_until_ready(gestures_forward(x, params))
    ref = reference_forward(x, params)
    assert out.shape == (B, dim)
    # approx reciprocal + bf16 operands -> loosened tolerances (see review)
    assert jnp.allclose(jnp.sum(out, axis=1), 1.0, atol=5e-3)
    assert jnp.allclose(out, ref, atol=5e-3, rtol=5e-3)

    # --- multi-block check (exercises the batch grid + partial last block) ---
    B2 = 1040  # -> grid of 3 blocks of 512 rows, last block partial
    x2 = jax.random.normal(kx2, (B2, 64), jnp.float32)
    out2 = jax.block_until_ready(gestures_forward(x2, params))
    ref2 = reference_forward(x2, params)
    assert out2.shape == (B2, dim)
    assert jnp.allclose(jnp.sum(out2, axis=1), 1.0, atol=5e-3)
    assert jnp.allclose(out2, ref2, atol=5e-3, rtol=5e-3)

    # get_label equivalent (plain JAX glue)
    pred_label = labels[int(jnp.argmax(out[0]))]
    assert pred_label in labels

    print("KERNEL_OK")
</pallas_src>

<mosaic_0001>
module attributes {stable_mosaic.version = 11 : i64} {
  func.func @gestures_kernel(%arg0: i32, %arg1: memref<8x64xbf16, #tpu.memory_space<vmem>>, %arg2: memref<64x32xbf16, #tpu.memory_space<vmem>>, %arg3: memref<1x32xf32, #tpu.memory_space<vmem>>, %arg4: memref<32x16xbf16, #tpu.memory_space<vmem>>, %arg5: memref<1x16xf32, #tpu.memory_space<vmem>>, %arg6: memref<16x5xbf16, #tpu.memory_space<vmem>>, %arg7: memref<1x5xf32, #tpu.memory_space<vmem>>, %arg8: memref<8x5xf32, #tpu.memory_space<vmem>>) attributes {dimension_semantics = [#tpu.dimension_semantics<parallel>], iteration_bounds = array<i64: 1>, scalar_prefetch = 0 : i64, scratch_operands = 0 : i64, tpu.core_type = #tpu.core_type<tc>, window_params = [{transform_indices = @transform_0, window_bounds = array<i64: 8, 64>}, {pipeline_mode = #tpu.pipeline_mode<synchronous>, transform_indices = @transform_1, window_bounds = array<i64: 64, 32>}, {pipeline_mode = #tpu.pipeline_mode<synchronous>, transform_indices = @transform_2, window_bounds = array<i64: 1, 32>}, {pipeline_mode = #tpu.pipeline_mode<synchronous>, transform_indices = @transform_3, window_bounds = array<i64: 32, 16>}, {pipeline_mode = #tpu.pipeline_mode<synchronous>, transform_indices = @transform_4, window_bounds = array<i64: 1, 16>}, {pipeline_mode = #tpu.pipeline_mode<synchronous>, transform_indices = @transform_5, window_bounds = array<i64: 16, 5>}, {pipeline_mode = #tpu.pipeline_mode<synchronous>, transform_indices = @transform_6, window_bounds = array<i64: 1, 5>}, {transform_indices = @transform_7, window_bounds = array<i64: 8, 5>}]} {
    %c0 = arith.constant 0 : index
    %c0_0 = arith.constant 0 : index
    %0 = vector.load %arg1[%c0, %c0_0] : memref<8x64xbf16, #tpu.memory_space<vmem>>, vector<8x64xbf16>
    %c0_1 = arith.constant 0 : index
    %c0_2 = arith.constant 0 : index
    %1 = vector.load %arg2[%c0_1, %c0_2] : memref<64x32xbf16, #tpu.memory_space<vmem>>, vector<64x32xbf16>
    %cst = arith.constant dense<0.000000e+00> : vector<8x32xf32>
    %2 = tpu.matmul %0, %1, %cst {dimension_numbers = #tpu.dot_dimension_numbers<[1], [0], [0], [1], [0, 0, 1, 1], [], []>} : vector<8x64xbf16>, vector<64x32xbf16>, vector<8x32xf32> -> vector<8x32xf32>
    %c0_3 = arith.constant 0 : index
    %c0_4 = arith.constant 0 : index
    %3 = vector.load %arg3[%c0_3, %c0_4] : memref<1x32xf32, #tpu.memory_space<vmem>>, vector<1x32xf32>
    %4 = vector.broadcast %3 : vector<1x32xf32> to vector<8x32xf32>
    %5 = arith.addf %2, %4 : vector<8x32xf32>
    %cst_5 = arith.constant 0.000000e+00 : f32
    %6 = vector.broadcast %cst_5 : f32 to vector<8x32xf32>
    %7 = arith.maximumf %5, %6 : vector<8x32xf32>
    %8 = arith.truncf %7 : vector<8x32xf32> to vector<8x32xbf16>
    %c0_6 = arith.constant 0 : index
    %c0_7 = arith.constant 0 : index
    %9 = vector.load %arg4[%c0_6, %c0_7] : memref<32x16xbf16, #tpu.memory_space<vmem>>, vector<32x16xbf16>
    %cst_8 = arith.constant dense<0.000000e+00> : vector<8x16xf32>
    %10 = tpu.matmul %8, %9, %cst_8 {dimension_numbers = #tpu.dot_dimension_numbers<[1], [0], [0], [1], [0, 0, 1, 1], [], []>} : vector<8x32xbf16>, vector<32x16xbf16>, vector<8x16xf32> -> vector<8x16xf32>
    %c0_9 = arith.constant 0 : index
    %c0_10 = arith.constant 0 : index
    %11 = vector.load %arg5[%c0_9, %c0_10] : memref<1x16xf32, #tpu.memory_space<vmem>>, vector<1x16xf32>
    %12 = vector.broadcast %11 : vector<1x16xf32> to vector<8x16xf32>
    %13 = arith.addf %10, %12 : vector<8x16xf32>
    %cst_11 = arith.constant 0.000000e+00 : f32
    %14 = vector.broadcast %cst_11 : f32 to vector<8x16xf32>
    %15 = arith.maximumf %13, %14 : vector<8x16xf32>
    %16 = arith.truncf %15 : vector<8x16xf32> to vector<8x16xbf16>
    %c0_12 = arith.constant 0 : index
    %c0_13 = arith.constant 0 : index
    %17 = vector.load %arg6[%c0_12, %c0_13] : memref<16x5xbf16, #tpu.memory_space<vmem>>, vector<16x5xbf16>
    %cst_14 = arith.constant dense<0.000000e+00> : vector<8x5xf32>
    %18 = tpu.matmul %16, %17, %cst_14 {dimension_numbers = #tpu.dot_dimension_numbers<[1], [0], [0], [1], [0, 0, 1, 1], [], []>} : vector<8x16xbf16>, vector<16x5xbf16>, vector<8x5xf32> -> vector<8x5xf32>
    %c0_15 = arith.constant 0 : index
    %c0_16 = arith.constant 0 : index
    %19 = vector.load %arg7[%c0_15, %c0_16] : memref<1x5xf32, #tpu.memory_space<vmem>>, vector<1x5xf32>
    %20 = vector.broadcast %19 : vector<1x5xf32> to vector<8x5xf32>
    %21 = arith.addf %18, %20 : vector<8x5xf32>
    %cst_17 = arith.constant dense<0xFF800000> : vector<8xf32>
    %22 = vector.multi_reduction <maximumf>, %21, %cst_17 [1] : vector<8x5xf32> to vector<8xf32>
    %23 = vector.shape_cast %22 : vector<8xf32> to vector<8x1xf32>
    %24 = vector.broadcast %23 : vector<8x1xf32> to vector<8x5xf32>
    %25 = arith.subf %21, %24 : vector<8x5xf32>
    %26 = math.exp %25 : vector<8x5xf32>
    %cst_18 = arith.constant dense<0.000000e+00> : vector<8xf32>
    %27 = vector.multi_reduction <add>, %26, %cst_18 [1] : vector<8x5xf32> to vector<8xf32>
    %28 = vector.shape_cast %27 : vector<8xf32> to vector<8x1xf32>
    %29 = tpu.reciprocal %28 {approx = true} : vector<8x1xf32> -> vector<8x1xf32>
    %30 = vector.broadcast %29 : vector<8x1xf32> to vector<8x5xf32>
    %31 = arith.mulf %26, %30 : vector<8x5xf32>
    %c0_19 = arith.constant 0 : index
    %c0_20 = arith.constant 0 : index
    %32 = vector.load %arg8[%c0_19, %c0_20] : memref<8x5xf32, #tpu.memory_space<vmem>>, vector<8x5xf32>
    tpu.vector_store %arg8[%c0_19, %c0_20], %31 {strides = array<i32>} : memref<8x5xf32, #tpu.memory_space<vmem>>, vector<8x5xf32>,
    return
  }
  func.func @transform_0(%arg0: i32) -> (i32, i32) {
    %c0_i32 = arith.constant 0 : i32
    %c0_i32_0 = arith.constant 0 : i32
    return %arg0, %c0_i32 : i32, i32
  }
  func.func @transform_1(%arg0: i32) -> (i32, i32) {
    %c0_i32 = arith.constant 0 : i32
    %c0_i32_0 = arith.constant 0 : i32
    %c0_i32_1 = arith.constant 0 : i32
    return %c0_i32, %c0_i32_0 : i32, i32
  }
  func.func @transform_2(%arg0: i32) -> (i32, i32) {
    %c0_i32 = arith.constant 0 : i32
    %c0_i32_0 = arith.constant 0 : i32
    %c0_i32_1 = arith.constant 0 : i32
    return %c0_i32, %c0_i32_0 : i32, i32
  }
  func.func @transform_3(%arg0: i32) -> (i32, i32) {
    %c0_i32 = arith.constant 0 : i32
    %c0_i32_0 = arith.constant 0 : i32
    %c0_i32_1 = arith.constant 0 : i32
    return %c0_i32, %c0_i32_0 : i32, i32
  }
  func.func @transform_4(%arg0: i32) -> (i32, i32) {
    %c0_i32 = arith.constant 0 : i32
    %c0_i32_0 = arith.constant 0 : i32
    %c0_i32_1 = arith.constant 0 : i32
    return %c0_i32, %c0_i32_0 : i32, i32
  }
  func.func @transform_5(%arg0: i32) -> (i32, i32) {
    %c0_i32 = arith.constant 0 : i32
    %c0_i32_0 = arith.constant 0 : i32
    %c0_i32_1 = arith.constant 0 : i32
    return %c0_i32, %c0_i32_0 : i32, i32
  }
  func.func @transform_6(%arg0: i32) -> (i32, i32) {
    %c0_i32 = arith.constant 0 : i32
    %c0_i32_0 = arith.constant 0 : i32
    %c0_i32_1 = arith.constant 0 : i32
    return %c0_i32, %c0_i32_0 : i32, i32
  }
  func.func @transform_7(%arg0: i32) -> (i32, i32) {
    %c0_i32 = arith.constant 0 : i32
    %c0_i32_0 = arith.constant 0 : i32
    return %arg0, %c0_i32 : i32, i32
  }
}

</mosaic_0001>

<llo_original>
// kernel: gestures_forward.1
$region0: #{gestures_forward.1}
  #allocation0 [shape = 'u32[]', space=smem, size = 0x4, offset = 0x4, fixed_abs, tag = 'smem constant byte address 0x4 - core index']
  #allocation1 [shape = 'u32[144,128]{1,0:T(1,128)}', space=vmem, size = 0x12000, scoped, tag = 'internal scratch']
  %s0 = inlined_call_operand.vmem [shape: bf16[8,64], index: 0, kind: input, shape index: {}]
  %s1 = inlined_call_operand.vmem [shape: bf16[64,32], index: 1, kind: input, shape index: {}]
  %s2 = inlined_call_operand.vmem [shape: f32[1,32], index: 2, kind: input, shape index: {}]
  %s3 = inlined_call_operand.vmem [shape: bf16[32,16], index: 3, kind: input, shape index: {}]
  %s4 = inlined_call_operand.vmem [shape: f32[1,16], index: 4, kind: input, shape index: {}]
  %s5 = inlined_call_operand.vmem [shape: bf16[16,5], index: 5, kind: input, shape index: {}]
  %s6 = inlined_call_operand.vmem [shape: f32[1,5], index: 6, kind: input, shape index: {}]
  %s7 = inlined_call_operand.hbm [shape: f32[8,5], index: 7, kind: output, shape index: {}]
  %s8 = sld [smem:[#allocation0]]
  $region38: #{gestures_forward.1} parent=0
    _
  %s10 = ssub.s32 1, %s8
  %s11 = scalar_select 0, %s10, %s8
  $region1: #{gestures_forward.1} parent=0
    #allocation2 [shape = 'u8[4096]{0}', space=vmem, size = 0x1000, scoped, tag = 'output window, operand 0, single buffered']
    #allocation3 [shape = 's32[1]{0}', space=sflag, size = 0x4, scoped, tag = 'scoped memory for gestures_forward.1']
    %12 = vsyncpa [#allocation3], 0
    // Predicated region
    $region2: #{gestures_forward.1} parent=1 // pred_check
      _
    $region3: #{gestures_forward.1} parent=1 // pred_check_branch
      %14 = sbr.rel (0) target = $region5
    $region4: #{gestures_forward.1} parent=1 // pred_region
      _
    $region5: #{gestures_forward.1} parent=1 // pred_fallthru
      _
    // Predicated region
    $region6: #{gestures_forward.1} parent=1 // pred_check
      _
    $region7: #{gestures_forward.1} parent=1 // pred_check_branch
      %16 = sbr.rel (0) target = $region9
    $region8: #{gestures_forward.1} parent=1 // pred_region
      _
    $region9: #{gestures_forward.1} parent=1 // pred_fallthru
      _
    // Predicated region
    $region10: #{gestures_forward.1} parent=1 // pred_check
      _
    $region11: #{gestures_forward.1} parent=1 // pred_check_branch
      %18 = sbr.rel (0) target = $region13
    $region12: #{gestures_forward.1} parent=1 // pred_region
      _
    $region13: #{gestures_forward.1} parent=1 // pred_fallthru
      _
    // Predicated region
    $region14: #{gestures_forward.1} parent=1 // pred_check
      _
    $region15: #{gestures_forward.1} parent=1 // pred_check_branch
      %20 = sbr.rel (0) target = $region17
    $region16: #{gestures_forward.1} parent=1 // pred_region
      _
    $region17: #{gestures_forward.1} parent=1 // pred_fallthru
      _
    // Predicated region
    $region18: #{gestures_forward.1} parent=1 // pred_check
      _
    $region19: #{gestures_forward.1} parent=1 // pred_check_branch
      %22 = sbr.rel (0) target = $region21
    $region20: #{gestures_forward.1} parent=1 // pred_region
      _
    $region21: #{gestures_forward.1} parent=1 // pred_fallthru
      _
    // Predicated region
    $region22: #{gestures_forward.1} parent=1 // pred_check
      _
    $region23: #{gestures_forward.1} parent=1 // pred_check_branch
      %24 = sbr.rel (0) target = $region25
    $region24: #{gestures_forward.1} parent=1 // pred_region
      _
    $region25: #{gestures_forward.1} parent=1 // pred_fallthru
      _
    // Predicated region
    $region26: #{gestures_forward.1} parent=1 // pred_check
      _
    $region27: #{gestures_forward.1} parent=1 // pred_check_branch
      %26 = sbr.rel (0) target = $region29
    $region28: #{gestures_forward.1} parent=1 // pred_region
      _
    $region29: #{gestures_forward.1} parent=1 // pred_fallthru
      _
    %v28 = vld [vmem:[%s0] sm:$0xf]
    %v29 = vld [vmem:[%s1] sm:$0xf]
    %v30 = vld [vmem:[%s1 + $0x4] sm:$0xf]
    %v31 = vld [vmem:[%s1 + $0x8] sm:$0xf]
    %v32 = vld [vmem:[%s1 + $0xc] sm:$0xf]
    %v33 = vld [vmem:[%s1 + $0x10] sm:$0xf]
    %v34 = vld [vmem:[%s1 + $0x14] sm:$0xf]
    %v35 = vld [vmem:[%s1 + $0x18] sm:$0xf]
    %v36 = vld [vmem:[%s1 + $0x1c] sm:$0xf]
    %v37 = vld [vmem:[%s2] sm:$0x1]
    %v39 = vlaneseq
    %v40 = vshrl.u32 %v39, 7
    %v41 = vsub.s32 0, %v40
    %v42 = vrot.slane %v37, %v41
    %v52 = vunpack.c.l.b16 %v29
    %v53 = vunpack.c.l.b16 %v30
    %v54 = vunpack.c.l.b16 %v31
    %v55 = vunpack.c.l.b16 %v32
    %v56 = vunpack.c.l.b16 %v33
    %v57 = vunpack.c.l.b16 %v34
    %v58 = vunpack.c.l.b16 %v35
    %v59 = vunpack.c.l.b16 %v36
    %v60 = vpack.c.b16 %v53, %v52
    %v61 = vpack.c.b16 %v55, %v54
    %v62 = vpack.c.b16 %v57, %v56
    %v63 = vpack.c.b16 %v59, %v58
    %vm68 = vcmask 523264
    %v70 = vsel %vm68, %v28, 0
    %72 = vmatprep.subr.bf16.mxu0 0
    %73 = vmatpush1.bf16.msra.mxu0 %v60
    %74 = vmatprep.subr.bf16.mxu0 0
    %75 = vmatpush1.bf16.msra.mxu0 %v61
    %76 = vmatprep.subr.bf16.mxu0 0
    %77 = vmatpush1.bf16.msra.mxu0 %v62
    %78 = vmatprep.subr.bf16.mxu0 0
    %79 = vmatpush1.bf16.msra.mxu0 %v63
    %80 = vmatprep.subr.bf16.mxu0 0
    %81 = vmatpush1.bf16.msra.mxu0 0
    %82 = vmatprep.subr.bf16.mxu0 0
    %83 = vmatpush1.bf16.msra.mxu0 0
    %84 = vmatprep.subr.bf16.mxu0 0
    %85 = vmatpush1.bf16.msra.mxu0 0
    %86 = vmatprep.subr.bf16.mxu0 0
    %87 = vmatpush1.bf16.msra.mxu0 0
    %88 = vmatprep.subr.bf16.mxu0 0
    %89 = vmatpush1.bf16.msra.mxu0 0
    %90 = vmatprep.subr.bf16.mxu0 0
    %91 = vmatpush1.bf16.msra.mxu0 0
    %92 = vmatprep.subr.bf16.mxu0 0
    %93 = vmatpush1.bf16.msra.mxu0 0
    %94 = vmatprep.subr.bf16.mxu0 0
    %95 = vmatpush1.bf16.msra.mxu0 0
    %96 = vmatprep.subr.bf16.mxu0 0
    %97 = vmatpush1.bf16.msra.mxu0 0
    %98 = vmatprep.subr.bf16.mxu0 0
    %99 = vmatpush1.bf16.msra.mxu0 0
    %100 = vmatprep.subr.bf16.mxu0 0
    %101 = vmatpush1.bf16.msra.mxu0 0
    %102 = vmatprep.subr.bf16.mxu0 0
    %103 = vmatpush1.bf16.msra.mxu0 0
    %104 = vmatprep.mubr.bf16.mxu0 0
    %105 = vmatmul.mubr.bf16.gmra.mrb[0].mxu0 %v70
    %v106 = vpop.f32.mrb[0].mxu0
    %v107 = vadd.f32 %v42, %v106
    %v108 = vpop.f32.mrb[0].mxu0
    %v109 = vpop.f32.mrb[0].mxu0
    %v110 = vpop.f32.mrb[0].mxu0
    %111 = vdwg.mxu0
    %v112 = vmax.f32 %v107, 0.0
    %v113 = vpack.c.bf16 %v112, %v112
    %v114 = vld [vmem:[%s3] sm:$0xf]
    %v115 = vld [vmem:[%s3 + $0x4] sm:$0xf]
    %v116 = vld [vmem:[%s3 + $0x8] sm:$0xf]
    %v117 = vld [vmem:[%s3 + $0xc] sm:$0xf]
    %v118 = vld [vmem:[%s4] sm:$0x1]
    %v120 = vlaneseq
    %v121 = vshrl.u32 %v120, 7
    %v122 = vsub.s32 0, %v121
    %v123 = vrot.slane %v118, %v122
    %v129 = vunpack.c.l.b16 %v114
    %v130 = vunpack.c.l.b16 %v115
    %v131 = vunpack.c.l.b16 %v116
    %v132 = vunpack.c.l.b16 %v117
    %v133 = vpack.c.b16 %v130, %v129
    %v134 = vpack.c.b16 %v132, %v131
    %vm137 = vcmask 261120
    %v139 = vsel %vm137, %v113, 0
    %141 = vmatprep.subr.bf16.mxu0 0
    %142 = vmatpush1.bf16.msra.mxu0 %v133
    %143 = vmatprep.subr.bf16.mxu0 0
    %144 = vmatpush1.bf16.msra.mxu0 %v134
    %145 = vmatprep.subr.bf16.mxu0 0
    %146 = vmatpush1.bf16.msra.mxu0 0
    %147 = vmatprep.subr.bf16.mxu0 0
    %148 = vmatpush1.bf16.msra.mxu0 0
    %149 = vmatprep.subr.bf16.mxu0 0
    %150 = vmatpush1.bf16.msra.mxu0 0
    %151 = vmatprep.subr.bf16.mxu0 0
    %152 = vmatpush1.bf16.msra.mxu0 0
    %153 = vmatprep.subr.bf16.mxu0 0
    %154 = vmatpush1.bf16.msra.mxu0 0
    %155 = vmatprep.subr.bf16.mxu0 0
    %156 = vmatpush1.bf16.msra.mxu0 0
    %157 = vmatprep.subr.bf16.mxu0 0
    %158 = vmatpush1.bf16.msra.mxu0 0
    %159 = vmatprep.subr.bf16.mxu0 0
    %160 = vmatpush1.bf16.msra.mxu0 0
    %161 = vmatprep.subr.bf16.mxu0 0
    %162 = vmatpush1.bf16.msra.mxu0 0
    %163 = vmatprep.subr.bf16.mxu0 0
    %164 = vmatpush1.bf16.msra.mxu0 0
    %165 = vmatprep.subr.bf16.mxu0 0
    %166 = vmatpush1.bf16.msra.mxu0 0
    %167 = vmatprep.subr.bf16.mxu0 0
    %168 = vmatpush1.bf16.msra.mxu0 0
    %169 = vmatprep.subr.bf16.mxu0 0
    %170 = vmatpush1.bf16.msra.mxu0 0
    %171 = vmatprep.subr.bf16.mxu0 0
    %172 = vmatpush1.bf16.msra.mxu0 0
    %173 = vmatprep.mubr.bf16.mxu0 0
    %174 = vmatmul.mubr.bf16.gmra.mrb[0].mxu0 %v139
    %v175 = vpop.f32.mrb[0].mxu0
    %v176 = vadd.f32 %v123, %v175
    %v177 = vpop.f32.mrb[0].mxu0
    %v178 = vpop.f32.mrb[0].mxu0
    %v179 = vpop.f32.mrb[0].mxu0
    %180 = vdwg.mxu0
    %v181 = vmax.f32 %v176, 0.0
    %v182 = vpack.c.bf16 %v181, %v181
    %v183 = vld [vmem:[%s5] sm:$0xf]
    %v184 = vld [vmem:[%s5 + $0x4] sm:$0xf]
    %v185 = vld [vmem:[%s6] sm:$0x1]
    %v187 = vlaneseq
    %v188 = vshrl.u32 %v187, 7
    %v189 = vsub.s32 0, %v188
    %v190 = vrot.slane %v185, %v189
    %v194 = vunpack.c.l.b16 %v183
    %v195 = vunpack.c.l.b16 %v184
    %v196 = vpack.c.b16 %v195, %v194
    %vm198 = vcmask 130048
    %v200 = vsel %vm198, %v182, 0
    %202 = vmatprep.subr.bf16.mxu0 0
    %203 = vmatpush1.bf16.msra.mxu0 %v196
    %204 = vmatprep.subr.bf16.mxu0 0
    %205 = vmatpush1.bf16.msra.mxu0 0
    %206 = vmatprep.subr.bf16.mxu0 0
    %207 = vmatpush1.bf16.msra.mxu0 0
    %208 = vmatprep.subr.bf16.mxu0 0
    %209 = vmatpush1.bf16.msra.mxu0 0
    %210 = vmatprep.subr.bf16.mxu0 0
    %211 = vmatpush1.bf16.msra.mxu0 0
    %212 = vmatprep.subr.bf16.mxu0 0
    %213 = vmatpush1.bf16.msra.mxu0 0
    %214 = vmatprep.subr.bf16.mxu0 0
    %215 = vmatpush1.bf16.msra.mxu0 0
    %216 = vmatprep.subr.bf16.mxu0 0
    %217 = vmatpush1.bf16.msra.mxu0 0
    %218 = vmatprep.subr.bf16.mxu0 0
    %219 = vmatpush1.bf16.msra.mxu0 0
    %220 = vmatprep.subr.bf16.mxu0 0
    %221 = vmatpush1.bf16.msra.mxu0 0
    %222 = vmatprep.subr.bf16.mxu0 0
    %223 = vmatpush1.bf16.msra.mxu0 0
    %224 = vmatprep.subr.bf16.mxu0 0
    %225 = vmatpush1.bf16.msra.mxu0 0
    %226 = vmatprep.subr.bf16.mxu0 0
    %227 = vmatpush1.bf16.msra.mxu0 0
    %228 = vmatprep.subr.bf16.mxu0 0
    %229 = vmatpush1.bf16.msra.mxu0 0
    %230 = vmatprep.subr.bf16.mxu0 0
    %231 = vmatpush1.bf16.msra.mxu0 0
    %232 = vmatprep.subr.bf16.mxu0 0
    %233 = vmatpush1.bf16.msra.mxu0 0
    %234 = vmatprep.mubr.bf16.mxu0 0
    %235 = vmatmul.mubr.bf16.gmra.mrb[0].mxu0 %v200
    %v236 = vpop.f32.mrb[0].mxu0
    %v237 = vadd.f32 %v190, %v236
    %v238 = vpop.f32.mrb[0].mxu0
    %v239 = vpop.f32.mrb[0].mxu0
    %v240 = vpop.f32.mrb[0].mxu0
    %241 = vdwg.mxu0
    %vm242 = vcmask 39936
    %v243 = vsel %vm242, %v237, -inf
    %244 = vmax.xlane.f32.xlu0 %v243
    %v245 = vpop.xlane.xlu0 %244
    %v246 = vsub.f32 %v237, %v245
    %v247 = vmul.f32 %v246, 1.442695
    %v248 = vpow.pop %v247
    %v249 = vsel %vm242, %v248, 0.0
    %250 = vadd.xlane.f32.xlu0 %v249
    %v251 = vpop.xlane.xlu0 %250
    %v252 = vrcp.pop %v251
    %v253 = vmul.f32 %v248, %v252
    %254 = vst.msk [vmem:[#allocation2] sm:$0xff] %vm242, %v253
    // Predicated region
    $region30: #{gestures_forward.1} parent=1 // pred_check
      _
    $region31: #{gestures_forward.1} parent=1 // pred_check_branch
      %256 = sbr.rel (0) target = $region33
    $region32: #{gestures_forward.1} parent=1 // pred_region
      %s258 = ssub.s32 128, 128
      %259 = vsyncadd [#allocation3], %s258
      %s261 = sshll.u32 [#allocation2], 4
      %s262 = int_to_ptr.vmem [resolvable:$true] %s261
      %264 = dma.vmem_to_hbm [thread:$0]  %s262, 128, %s7, [#allocation3]
    $region33: #{gestures_forward.1} parent=1 // pred_fallthru
      _
    // Predicated region
    $region34: #{gestures_forward.1} parent=1 // pred_check
      _
    $region35: #{gestures_forward.1} parent=1 // pred_check_branch
      %266 = sbr.rel (0) target = $region37
    $region36: #{gestures_forward.1} parent=1 // pred_region
      %267 = dma.done [#allocation3], 128
    $region37: #{gestures_forward.1} parent=1 // pred_fallthru
      _
    %268 = vsyncpa [#allocation3], 1

</llo_original>
